<compile_context>
chip_gen: v5e
topology: v5e:2x2
jax: 0.10.0
libtpu: 0.0.40
codegen_flags: <defaults>
</compile_context>

<pallas_src>
import numpy as np
import jax
import jax.numpy as jnp
from jax.experimental import pallas as pl
from jax.experimental.pallas import tpu as pltpu

# ----------------------------------------------------------------------------
# Config: constructor args of GridCLIPRegionModel (small-but-consistent values)
# ----------------------------------------------------------------------------
NUM_LEVELS = 16          # default
LEVEL_DIM = 8            # default
BASE_RESOLUTION = 16     # default of GridEncoder
PER_LEVEL_SCALE = 2.0    # default
LOG2_HASHMAP_SIZE = 14   # reduced from default 24 -> small synthetic table (still exercises dense + hash paths)
MLP_WIDTH = 256          # default
MLP_DEPTH = 2            # default
TEXT_REP = 128           # reduced from default 512 (constructor arg)
IMAGE_REP = 128
CLIP_REGION_REP = 128
ST_REGION_REP = 128
BOUNDS = 10.0            # default

FEAT_DIM = NUM_LEVELS * LEVEL_DIM                                  # 128, MLP input
OUT_DIM = TEXT_REP + IMAGE_REP + CLIP_REGION_REP + ST_REGION_REP   # 512

_PRIMES = (1, 2654435761, 805459861)  # torch-ngp fast_hash primes for D=3

# Corner bit pattern (8, 3) for trilinear interpolation.
_CORNER_BITS = np.asarray([[(c >> d) & 1 for d in range(3)] for c in range(8)],
                          np.uint32)


# ----------------------------------------------------------------------------
# Hash-grid metadata (mirrors torch-ngp GridEncoder.__init__, align_corners=False)
# ----------------------------------------------------------------------------
def _grid_level_meta():
    offsets, resolutions, scales = [], [], []
    off = 0
    max_params = 2 ** LOG2_HASHMAP_SIZE
    for lvl in range(NUM_LEVELS):
        scale = (PER_LEVEL_SCALE ** lvl) * BASE_RESOLUTION - 1.0   # CUDA kernel scale
        res = int(np.ceil(scale)) + 1                              # CUDA kernel resolution
        scales.append(scale)
        resolutions.append(res)
        res_off = int(np.ceil(BASE_RESOLUTION * PER_LEVEL_SCALE ** lvl))
        params = min(max_params, (res_off + 1) ** 3)               # align_corners=False
        params = int(np.ceil(params / 8) * 8)
        offsets.append(off)
        off += params
    offsets.append(off)
    return offsets, resolutions, scales


def _build_gather_meta(offsets, resolutions, scales):
    """Static per-level constants for the vectorized gather (numpy, host-side)."""
    L = NUM_LEVELS
    eff_strides = np.zeros((L, 3), np.uint32)
    overflow = np.zeros((L,), np.bool_)
    hsize = np.zeros((L,), np.uint32)
    base = np.zeros((L,), np.int32)
    for lvl in range(L):
        hs = offsets[lvl + 1] - offsets[lvl]
        hsize[lvl] = hs
        base[lvl] = offsets[lvl]
        stride = 1
        for d in range(3):
            if stride <= hs:                       # CUDA get_grid_index loop condition
                eff_strides[lvl, d] = stride
                stride *= resolutions[lvl] + 1     # align_corners=False
        overflow[lvl] = stride > hs                # hash path when dense grid overflows
        # NOTE: on the dense path the modulo below is a no-op (index < stride <= hsize),
        # matching the CUDA kernel which applies `% hashmap_size` unconditionally.
    return (np.asarray(scales, np.float32), eff_strides, overflow, hsize, base)


# ----------------------------------------------------------------------------
# Hash-grid encode in plain JAX: one batched gather + fused trilinear reduction.
# Returns the already-reduced feature vector so cf/cw never round-trip HBM.
# ----------------------------------------------------------------------------
def hash_grid_encode(u01, embeddings, meta):
    """u01: (B, 3) points in [0, 1].  Returns h (B, NUM_LEVELS*LEVEL_DIM) bf16."""
    scales, eff_strides, overflow, hsize, base = meta
    B = u01.shape[0]

    scales_j = jnp.asarray(scales)                                   # (L,)
    pos = u01[:, None, :] * scales_j[None, :, None] + 0.5            # (B,L,3) align_corners=False
    pos_floor = jnp.floor(pos)
    frac = pos - pos_floor                                           # (B,L,3)
    pos_grid = pos_floor.astype(jnp.uint32)

    corners = jnp.asarray(_CORNER_BITS, jnp.uint32)                  # (8,3)
    pg = pos_grid[:, :, None, :] + corners[None, None, :, :]         # (B,L,8,3)

    strides_j = jnp.asarray(eff_strides)[None, :, None, :]           # (1,L,1,3) uint32
    dense = (pg[..., 0] * strides_j[..., 0]
             + pg[..., 1] * strides_j[..., 1]
             + pg[..., 2] * strides_j[..., 2])                       # (B,L,8) uint32
    p = jnp.asarray(_PRIMES, jnp.uint32)
    hashed = (pg[..., 0] * p[0]) ^ (pg[..., 1] * p[1]) ^ (pg[..., 2] * p[2])

    idx = jnp.where(jnp.asarray(overflow)[None, :, None], hashed, dense)
    idx = idx % jnp.asarray(hsize)[None, :, None]
    flat = jnp.asarray(base)[None, :, None] + idx.astype(jnp.int32)  # (B,L,8)

    cf = jnp.take(embeddings, flat.reshape(-1), axis=0)              # single batched gather
    cf = cf.reshape(B, NUM_LEVELS, 8, LEVEL_DIM)                     # (B,L,8,D) f32

    bits = jnp.asarray(_CORNER_BITS, jnp.float32)[None, None, :, :]  # (1,1,8,3)
    w = jnp.prod(bits * frac[:, :, None, :]
                 + (1.0 - bits) * (1.0 - frac[:, :, None, :]), axis=-1)  # (B,L,8)

    # Trilinear corner reduction fused into the XLA gather epilogue (f32); the
    # level-major reshape is the natural contiguous layout -> no transpose pass.
    h = jnp.sum(cf * w[..., None], axis=2)                           # (B,L,D) f32
    return h.reshape(B, FEAT_DIM).astype(jnp.bfloat16)               # (B, 128) bf16


# ----------------------------------------------------------------------------
# Pallas kernel: 3-layer MLP (Linear/ReLU x2, Linear) -- the FLOP hot path.
# ----------------------------------------------------------------------------
def _mlp_kernel(h_ref, w1_ref, b1_ref, w2_ref, b2_ref, w3_ref, b3_ref, out_ref):
    # bf16 MXU matmuls with f32 accumulation; bias add / ReLU stay f32
    # (v5e has no bf16 VPU).
    h = jnp.dot(h_ref[...], w1_ref[...],
                preferred_element_type=jnp.float32) + b1_ref[...]
    h = jnp.maximum(h, 0.0)
    h = jnp.dot(h.astype(jnp.bfloat16), w2_ref[...],
                preferred_element_type=jnp.float32) + b2_ref[...]
    h = jnp.maximum(h, 0.0)
    out = jnp.dot(h.astype(jnp.bfloat16), w3_ref[...],
                  preferred_element_type=jnp.float32) + b3_ref[...]
    out_ref[...] = out.astype(out_ref.dtype)


def _round_up(n, m):
    return -(-n // m) * m


def _tensorcores_per_chip():
    try:
        kind = jax.devices()[0].device_kind.lower()
    except Exception:
        return 1
    return 2 if "v7" in kind else 1


def _default_bm(B):
    """Batch tile.  Single-TC chips (v5e/v6e, 128 MiB VMEM): largest tile up to
    1024.  2-TC chips (v7x, 64 MiB VMEM): cap at 512 and prefer >=2 grid steps
    so both TensorCores get work.  Sweep 512/1024/2048 at production sizes."""
    n_tc = _tensorcores_per_chip()
    cap = 512 if n_tc > 1 else 1024
    if n_tc > 1 and B > 16:
        return min(_round_up(_round_up(B, 2) // 2, 8), cap)
    if B <= cap:
        return B                 # one block; first dim equals full array extent
    return cap                   # multiple of 8 -> valid multi-step block


def post_grid_mlp(h, params, *, bm=None, out_dtype=jnp.float32):
    """h: (B, FEAT_DIM) bf16 -> (B, OUT_DIM) out_dtype via the Pallas MLP kernel."""
    B = h.shape[0]
    W1, b1, W2, b2, W3, b3 = params
    H, O = MLP_WIDTH, OUT_DIM
    if bm is None:
        bm = _default_bm(B)
    B_pad = _round_up(B, bm)
    h_in = h if B_pad == B else jnp.pad(h, ((0, B_pad - B), (0, 0)))
    # VMEM @ bm=1024: h bf16 0.25MB + out 2MB (f32), double-buffered, plus
    # ~0.5MB of resident bf16 weights -> ~5 MiB, far below every generation's
    # scoped limit; no vmem_limit_bytes override needed.
    out = pl.pallas_call(
        _mlp_kernel,
        out_shape=jax.ShapeDtypeStruct((B_pad, O), out_dtype),
        grid_spec=pltpu.PrefetchScalarGridSpec(
            num_scalar_prefetch=0,
            grid=(B_pad // bm,),
            in_specs=[
                pl.BlockSpec((bm, FEAT_DIM), lambda i: (i, 0)),   # h  (bf16)
                pl.BlockSpec((FEAT_DIM, H), lambda i: (0, 0)),    # W1 (bf16)
                pl.BlockSpec((1, H), lambda i: (0, 0)),           # b1 (f32)
                pl.BlockSpec((H, H), lambda i: (0, 0)),           # W2 (bf16)
                pl.BlockSpec((1, H), lambda i: (0, 0)),           # b2 (f32)
                pl.BlockSpec((H, O), lambda i: (0, 0)),           # W3 (bf16)
                pl.BlockSpec((1, O), lambda i: (0, 0)),           # b3 (f32)
            ],
            out_specs=pl.BlockSpec((bm, O), lambda i: (i, 0)),    # lane-dense 512-wide
        ),
        compiler_params=pltpu.CompilerParams(
            dimension_semantics=("parallel",)),
    )(h_in, W1, b1, W2, b2, W3, b3)
    return out if B_pad == B else out[:B]


def post_grid_mlp_reference(h, params):
    """Plain-JAX mirror of the Pallas kernel (same dtype sequence) for checking."""
    W1, b1, W2, b2, W3, b3 = params
    z = jnp.maximum(jnp.dot(h, W1, preferred_element_type=jnp.float32) + b1, 0.0)
    z = jnp.maximum(jnp.dot(z.astype(jnp.bfloat16), W2,
                            preferred_element_type=jnp.float32) + b2, 0.0)
    return jnp.dot(z.astype(jnp.bfloat16), W3,
                   preferred_element_type=jnp.float32) + b3


# ----------------------------------------------------------------------------
# Parameter init (deterministic, synthetic -- no checkpoint load)
# ----------------------------------------------------------------------------
def init_params(key, total_embedding_rows):
    keys = jax.random.split(key, 4)
    # GridEncoder.reset_parameters(): uniform(-1e-4, 1e-4)
    embeddings = jax.random.uniform(
        keys[0], (total_embedding_rows, LEVEL_DIM), jnp.float32, -1e-4, 1e-4)

    def linear(k, fan_in, fan_out):
        # stored as (in, out) == torch nn.Linear.weight.T; weights bf16 for the
        # MXU, biases f32.
        bound = 1.0 / np.sqrt(fan_in)
        kw, kb = jax.random.split(k)
        W = jax.random.uniform(kw, (fan_in, fan_out), jnp.float32,
                               -bound, bound).astype(jnp.bfloat16)
        b = jax.random.uniform(kb, (1, fan_out), jnp.float32, -bound, bound)
        return W, b

    # MLP(depth=2): Linear(FEAT,H) ReLU Linear(H,H) ReLU Linear(H,OUT)
    W1, b1 = linear(keys[1], FEAT_DIM, MLP_WIDTH)
    W2, b2 = linear(keys[2], MLP_WIDTH, MLP_WIDTH)
    W3, b3 = linear(keys[3], MLP_WIDTH, OUT_DIM)
    return embeddings, (W1, b1, W2, b2, W3, b3)


# ----------------------------------------------------------------------------
# Full forward, mirroring GridCLIPRegionModel.forward
# ----------------------------------------------------------------------------
def grid_clip_region_forward(x, embeddings, mlp_params, meta,
                             min_bounds, max_bounds, *, bm=None):
    bounded_x = (x - min_bounds) / (max_bounds - min_bounds)          # -> [0,1]
    # GridEncoder.forward(inputs, bound=1.0) maps (inputs + 1) / 2.  bounded_x is
    # already in [0,1], so u01 lands in [0.5,1] -- this faithfully mirrors the
    # reference model (it never rescales bounded_x to [-1,1]); kept as-is.
    u01 = (bounded_x + 1.0) / 2.0
    h = hash_grid_encode(u01, embeddings, meta)                       # (B, 128) bf16
    result = post_grid_mlp(h, mlp_params, bm=bm)                      # (B, OUT_DIM)
    t = TEXT_REP
    i = t + IMAGE_REP
    c = i + CLIP_REGION_REP
    s = c + ST_REGION_REP
    label_latent = result[..., :t]
    image_latent = result[..., t:i]          # _image_head is nn.Identity()
    clip_region_latent = result[..., i:c]
    st_region_latent = result[..., c:s]
    return label_latent, image_latent, clip_region_latent, st_region_latent


if __name__ == "__main__":
    offsets, resolutions, scales = _grid_level_meta()
    meta = _build_gather_meta(offsets, resolutions, scales)

    key = jax.random.PRNGKey(0)
    k_param, k_x = jax.random.split(key)
    embeddings, mlp_params = init_params(k_param, offsets[-1])

    B = 32
    x = jax.random.uniform(k_x, (B, 3), jnp.float32, -BOUNDS, BOUNDS)
    min_bounds = -jnp.ones((3,), jnp.float32) * BOUNDS
    max_bounds = jnp.ones((3,), jnp.float32) * BOUNDS

    fwd = jax.jit(lambda xx, emb, params: grid_clip_region_forward(
        xx, emb, params, meta, min_bounds, max_bounds))
    outs = jax.block_until_ready(fwd(x, embeddings, mlp_params))

    label_latent, image_latent, clip_region_latent, st_region_latent = outs
    assert label_latent.shape == (B, TEXT_REP)
    assert image_latent.shape == (B, IMAGE_REP)
    assert clip_region_latent.shape == (B, CLIP_REGION_REP)
    assert st_region_latent.shape == (B, ST_REGION_REP)

    # Correctness: compare the Pallas MLP kernel against a plain-JAX mirror on
    # the same reduced features h (identical dtype sequence).
    bounded_x = (x - min_bounds) / (max_bounds - min_bounds)
    u01 = (bounded_x + 1.0) / 2.0
    h = hash_grid_encode(u01, embeddings, meta)
    got = jax.block_until_ready(post_grid_mlp(h, mlp_params))
    ref = jax.block_until_ready(post_grid_mlp_reference(h, mlp_params))
    err = float(jnp.max(jnp.abs(got - ref)))
    assert err < 5e-3, f"kernel/reference mismatch: max abs err = {err}"

    print("KERNEL_OK")
</pallas_src>

<mosaic_0001>
module attributes {stable_mosaic.version = 11 : i64} {
  func.func @_mlp_kernel(%arg0: i32, %arg1: memref<32x128xbf16, #tpu.memory_space<vmem>>, %arg2: memref<128x256xbf16, #tpu.memory_space<vmem>>, %arg3: memref<1x256xf32, #tpu.memory_space<vmem>>, %arg4: memref<256x256xbf16, #tpu.memory_space<vmem>>, %arg5: memref<1x256xf32, #tpu.memory_space<vmem>>, %arg6: memref<256x512xbf16, #tpu.memory_space<vmem>>, %arg7: memref<1x512xf32, #tpu.memory_space<vmem>>, %arg8: memref<32x512xf32, #tpu.memory_space<vmem>>) attributes {dimension_semantics = [#tpu.dimension_semantics<parallel>], iteration_bounds = array<i64: 1>, scalar_prefetch = 0 : i64, scratch_operands = 0 : i64, tpu.core_type = #tpu.core_type<tc>, window_params = [{transform_indices = @transform_0, window_bounds = array<i64: 32, 128>}, {pipeline_mode = #tpu.pipeline_mode<synchronous>, transform_indices = @transform_1, window_bounds = array<i64: 128, 256>}, {pipeline_mode = #tpu.pipeline_mode<synchronous>, transform_indices = @transform_2, window_bounds = array<i64: 1, 256>}, {pipeline_mode = #tpu.pipeline_mode<synchronous>, transform_indices = @transform_3, window_bounds = array<i64: 256, 256>}, {pipeline_mode = #tpu.pipeline_mode<synchronous>, transform_indices = @transform_4, window_bounds = array<i64: 1, 256>}, {pipeline_mode = #tpu.pipeline_mode<synchronous>, transform_indices = @transform_5, window_bounds = array<i64: 256, 512>}, {pipeline_mode = #tpu.pipeline_mode<synchronous>, transform_indices = @transform_6, window_bounds = array<i64: 1, 512>}, {transform_indices = @transform_7, window_bounds = array<i64: 32, 512>}]} {
    %c0 = arith.constant 0 : index
    %c0_0 = arith.constant 0 : index
    %0 = vector.load %arg1[%c0, %c0_0] : memref<32x128xbf16, #tpu.memory_space<vmem>>, vector<32x128xbf16>
    %c0_1 = arith.constant 0 : index
    %c0_2 = arith.constant 0 : index
    %1 = vector.load %arg2[%c0_1, %c0_2] : memref<128x256xbf16, #tpu.memory_space<vmem>>, vector<128x256xbf16>
    %cst = arith.constant dense<0.000000e+00> : vector<32x256xf32>
    %2 = tpu.matmul %0, %1, %cst {dimension_numbers = #tpu.dot_dimension_numbers<[1], [0], [0], [1], [0, 0, 1, 1], [], []>} : vector<32x128xbf16>, vector<128x256xbf16>, vector<32x256xf32> -> vector<32x256xf32>
    %c0_3 = arith.constant 0 : index
    %c0_4 = arith.constant 0 : index
    %3 = vector.load %arg3[%c0_3, %c0_4] : memref<1x256xf32, #tpu.memory_space<vmem>>, vector<1x256xf32>
    %4 = vector.broadcast %3 : vector<1x256xf32> to vector<32x256xf32>
    %5 = arith.addf %2, %4 : vector<32x256xf32>
    %cst_5 = arith.constant 0.000000e+00 : f32
    %6 = vector.broadcast %cst_5 : f32 to vector<32x256xf32>
    %7 = arith.maximumf %5, %6 : vector<32x256xf32>
    %8 = arith.truncf %7 : vector<32x256xf32> to vector<32x256xbf16>
    %c0_6 = arith.constant 0 : index
    %c0_7 = arith.constant 0 : index
    %9 = vector.load %arg4[%c0_6, %c0_7] : memref<256x256xbf16, #tpu.memory_space<vmem>>, vector<256x256xbf16>
    %cst_8 = arith.constant dense<0.000000e+00> : vector<32x256xf32>
    %10 = tpu.matmul %8, %9, %cst_8 {dimension_numbers = #tpu.dot_dimension_numbers<[1], [0], [0], [1], [0, 0, 1, 1], [], []>} : vector<32x256xbf16>, vector<256x256xbf16>, vector<32x256xf32> -> vector<32x256xf32>
    %c0_9 = arith.constant 0 : index
    %c0_10 = arith.constant 0 : index
    %11 = vector.load %arg5[%c0_9, %c0_10] : memref<1x256xf32, #tpu.memory_space<vmem>>, vector<1x256xf32>
    %12 = vector.broadcast %11 : vector<1x256xf32> to vector<32x256xf32>
    %13 = arith.addf %10, %12 : vector<32x256xf32>
    %cst_11 = arith.constant 0.000000e+00 : f32
    %14 = vector.broadcast %cst_11 : f32 to vector<32x256xf32>
    %15 = arith.maximumf %13, %14 : vector<32x256xf32>
    %16 = arith.truncf %15 : vector<32x256xf32> to vector<32x256xbf16>
    %c0_12 = arith.constant 0 : index
    %c0_13 = arith.constant 0 : index
    %17 = vector.load %arg6[%c0_12, %c0_13] : memref<256x512xbf16, #tpu.memory_space<vmem>>, vector<256x512xbf16>
    %cst_14 = arith.constant dense<0.000000e+00> : vector<32x512xf32>
    %18 = tpu.matmul %16, %17, %cst_14 {dimension_numbers = #tpu.dot_dimension_numbers<[1], [0], [0], [1], [0, 0, 1, 1], [], []>} : vector<32x256xbf16>, vector<256x512xbf16>, vector<32x512xf32> -> vector<32x512xf32>
    %c0_15 = arith.constant 0 : index
    %c0_16 = arith.constant 0 : index
    %19 = vector.load %arg7[%c0_15, %c0_16] : memref<1x512xf32, #tpu.memory_space<vmem>>, vector<1x512xf32>
    %20 = vector.broadcast %19 : vector<1x512xf32> to vector<32x512xf32>
    %21 = arith.addf %18, %20 : vector<32x512xf32>
    %c0_17 = arith.constant 0 : index
    %c0_18 = arith.constant 0 : index
    %22 = vector.load %arg8[%c0_17, %c0_18] : memref<32x512xf32, #tpu.memory_space<vmem>>, vector<32x512xf32>
    tpu.vector_store %arg8[%c0_17, %c0_18], %21 {strides = array<i32>} : memref<32x512xf32, #tpu.memory_space<vmem>>, vector<32x512xf32>,
    return
  }
  func.func @transform_0(%arg0: i32) -> (i32, i32) {
    %c0_i32 = arith.constant 0 : i32
    %c0_i32_0 = arith.constant 0 : i32
    return %arg0, %c0_i32 : i32, i32
  }
  func.func @transform_1(%arg0: i32) -> (i32, i32) {
    %c0_i32 = arith.constant 0 : i32
    %c0_i32_0 = arith.constant 0 : i32
    %c0_i32_1 = arith.constant 0 : i32
    return %c0_i32, %c0_i32_0 : i32, i32
  }
  func.func @transform_2(%arg0: i32) -> (i32, i32) {
    %c0_i32 = arith.constant 0 : i32
    %c0_i32_0 = arith.constant 0 : i32
    %c0_i32_1 = arith.constant 0 : i32
    return %c0_i32, %c0_i32_0 : i32, i32
  }
  func.func @transform_3(%arg0: i32) -> (i32, i32) {
    %c0_i32 = arith.constant 0 : i32
    %c0_i32_0 = arith.constant 0 : i32
    %c0_i32_1 = arith.constant 0 : i32
    return %c0_i32, %c0_i32_0 : i32, i32
  }
  func.func @transform_4(%arg0: i32) -> (i32, i32) {
    %c0_i32 = arith.constant 0 : i32
    %c0_i32_0 = arith.constant 0 : i32
    %c0_i32_1 = arith.constant 0 : i32
    return %c0_i32, %c0_i32_0 : i32, i32
  }
  func.func @transform_5(%arg0: i32) -> (i32, i32) {
    %c0_i32 = arith.constant 0 : i32
    %c0_i32_0 = arith.constant 0 : i32
    %c0_i32_1 = arith.constant 0 : i32
    return %c0_i32, %c0_i32_0 : i32, i32
  }
  func.func @transform_6(%arg0: i32) -> (i32, i32) {
    %c0_i32 = arith.constant 0 : i32
    %c0_i32_0 = arith.constant 0 : i32
    %c0_i32_1 = arith.constant 0 : i32
    return %c0_i32, %c0_i32_0 : i32, i32
  }
  func.func @transform_7(%arg0: i32) -> (i32, i32) {
    %c0_i32 = arith.constant 0 : i32
    %c0_i32_0 = arith.constant 0 : i32
    return %arg0, %c0_i32 : i32, i32
  }
}

</mosaic_0001>

<llo_original>
// kernel: _lambda_.1
$region0: #{_lambda_.1}
  #allocation0 [shape = 'u32[]', space=smem, size = 0x4, offset = 0x4, fixed_abs, tag = 'smem constant byte address 0x4 - core index']
  #allocation1 [shape = 'u32[72,128]{1,0:T(1,128)}', space=vmem, size = 0x9000, scoped, tag = 'internal scratch']
  %s0 = inlined_call_operand.vmem [shape: bf16[32,128], index: 0, kind: input, shape index: {}]
  %s1 = inlined_call_operand.vmem [shape: bf16[128,256], index: 1, kind: input, shape index: {}]
  %s2 = inlined_call_operand.vmem [shape: f32[1,256], index: 2, kind: input, shape index: {}]
  %s3 = inlined_call_operand.vmem [shape: bf16[256,256], index: 3, kind: input, shape index: {}]
  %s4 = inlined_call_operand.vmem [shape: f32[1,256], index: 4, kind: input, shape index: {}]
  %s5 = inlined_call_operand.vmem [shape: bf16[256,512], index: 5, kind: input, shape index: {}]
  %s6 = inlined_call_operand.vmem [shape: f32[1,512], index: 6, kind: input, shape index: {}]
  %s7 = inlined_call_operand.vmem [shape: f32[32,512], index: 7, kind: output, shape index: {}]
  %s8 = sld [smem:[#allocation0]]
  $region38: #{_lambda_.1} parent=0
    _
  %s10 = ssub.s32 1, %s8
  %s11 = scalar_select 0, %s10, %s8
  // Predicated region
  $region2: #{_lambda_.1} parent=0 // pred_check
    _
  $region3: #{_lambda_.1} parent=0 // pred_check_branch
    %13 = sbr.rel (0) target = $region5
  $region4: #{_lambda_.1} parent=0 // pred_region
    _
  $region5: #{_lambda_.1} parent=0 // pred_fallthru
    _
  // Predicated region
  $region6: #{_lambda_.1} parent=0 // pred_check
    _
  $region7: #{_lambda_.1} parent=0 // pred_check_branch
    %15 = sbr.rel (0) target = $region9
  $region8: #{_lambda_.1} parent=0 // pred_region
    _
  $region9: #{_lambda_.1} parent=0 // pred_fallthru
    _
  // Predicated region
  $region10: #{_lambda_.1} parent=0 // pred_check
    _
  $region11: #{_lambda_.1} parent=0 // pred_check_branch
    %17 = sbr.rel (0) target = $region13
  $region12: #{_lambda_.1} parent=0 // pred_region
    _
  $region13: #{_lambda_.1} parent=0 // pred_fallthru
    _
  // Predicated region
  $region14: #{_lambda_.1} parent=0 // pred_check
    _
  $region15: #{_lambda_.1} parent=0 // pred_check_branch
    %19 = sbr.rel (0) target = $region17
  $region16: #{_lambda_.1} parent=0 // pred_region
    _
  $region17: #{_lambda_.1} parent=0 // pred_fallthru
    _
  // Predicated region
  $region18: #{_lambda_.1} parent=0 // pred_check
    _
  $region19: #{_lambda_.1} parent=0 // pred_check_branch
    %21 = sbr.rel (0) target = $region21
  $region20: #{_lambda_.1} parent=0 // pred_region
    _
  $region21: #{_lambda_.1} parent=0 // pred_fallthru
    _
  // Predicated region
  $region22: #{_lambda_.1} parent=0 // pred_check
    _
  $region23: #{_lambda_.1} parent=0 // pred_check_branch
    %23 = sbr.rel (0) target = $region25
  $region24: #{_lambda_.1} parent=0 // pred_region
    _
  $region25: #{_lambda_.1} parent=0 // pred_fallthru
    _
  // Predicated region
  $region26: #{_lambda_.1} parent=0 // pred_check
    _
  $region27: #{_lambda_.1} parent=0 // pred_check_branch
    %25 = sbr.rel (0) target = $region29
  $region28: #{_lambda_.1} parent=0 // pred_region
    _
  $region29: #{_lambda_.1} parent=0 // pred_fallthru
    _
  %v26 = vld [vmem:[%s0] sm:$0xf]
  %v27 = vld [vmem:[%s0 + $0x4] sm:$0xf]
  %v28 = vld [vmem:[%s0 + $0x8] sm:$0xf]
  %v29 = vld [vmem:[%s0 + $0xc] sm:$0xf]
  %v30 = vld [vmem:[%s1] sm:$0xff]
  %v31 = vld [vmem:[%s1 + $0x8] sm:$0xff]
  %v32 = vld [vmem:[%s1 + $0x10] sm:$0xff]
  %v33 = vld [vmem:[%s1 + $0x18] sm:$0xff]
  %v34 = vld [vmem:[%s1 + $0x20] sm:$0xff]
  %v35 = vld [vmem:[%s1 + $0x28] sm:$0xff]
  %v36 = vld [vmem:[%s1 + $0x30] sm:$0xff]
  %v37 = vld [vmem:[%s1 + $0x38] sm:$0xff]
  %v38 = vld [vmem:[%s1 + $0x40] sm:$0xff]
  %v39 = vld [vmem:[%s1 + $0x48] sm:$0xff]
  %v40 = vld [vmem:[%s1 + $0x50] sm:$0xff]
  %v41 = vld [vmem:[%s1 + $0x58] sm:$0xff]
  %v42 = vld [vmem:[%s1 + $0x60] sm:$0xff]
  %v43 = vld [vmem:[%s1 + $0x68] sm:$0xff]
  %v44 = vld [vmem:[%s1 + $0x70] sm:$0xff]
  %v45 = vld [vmem:[%s1 + $0x78] sm:$0xff]
  %v46 = vld [vmem:[%s2] sm:$0x3]
  %v48 = vperm.slane %v46, 0
  %v49 = vperm.slane %v46, 1
  %v56 = vunpack.c.l.b16 %v26
  %v57 = vunpack.c.l.b16 %v27
  %v58 = vunpack.c.l.b16 %v28
  %v59 = vunpack.c.l.b16 %v29
  %v60 = vpack.c.b16 %v57, %v56
  %v61 = vpack.c.b16 %v59, %v58
  %v80 = vunpack.c.l.b16 %v30
  %v81 = vunpack.c.h.b16 %v30
  %v82 = vunpack.c.l.b16 %v31
  %v83 = vunpack.c.h.b16 %v31
  %v84 = vunpack.c.l.b16 %v32
  %v85 = vunpack.c.h.b16 %v32
  %v86 = vunpack.c.l.b16 %v33
  %v87 = vunpack.c.h.b16 %v33
  %v88 = vunpack.c.l.b16 %v34
  %v89 = vunpack.c.h.b16 %v34
  %v90 = vunpack.c.l.b16 %v35
  %v91 = vunpack.c.h.b16 %v35
  %v92 = vunpack.c.l.b16 %v36
  %v93 = vunpack.c.h.b16 %v36
  %v94 = vunpack.c.l.b16 %v37
  %v95 = vunpack.c.h.b16 %v37
  %v96 = vunpack.c.l.b16 %v38
  %v97 = vunpack.c.h.b16 %v38
  %v98 = vunpack.c.l.b16 %v39
  %v99 = vunpack.c.h.b16 %v39
  %v100 = vunpack.c.l.b16 %v40
  %v101 = vunpack.c.h.b16 %v40
  %v102 = vunpack.c.l.b16 %v41
  %v103 = vunpack.c.h.b16 %v41
  %v104 = vunpack.c.l.b16 %v42
  %v105 = vunpack.c.h.b16 %v42
  %v106 = vunpack.c.l.b16 %v43
  %v107 = vunpack.c.h.b16 %v43
  %v108 = vunpack.c.l.b16 %v44
  %v109 = vunpack.c.h.b16 %v44
  %v110 = vunpack.c.l.b16 %v45
  %v111 = vunpack.c.h.b16 %v45
  %v112 = vpack.c.b16 %v82, %v80
  %v113 = vpack.c.b16 %v83, %v81
  %v114 = vpack.c.b16 %v86, %v84
  %v115 = vpack.c.b16 %v87, %v85
  %v116 = vpack.c.b16 %v90, %v88
  %v117 = vpack.c.b16 %v91, %v89
  %v118 = vpack.c.b16 %v94, %v92
  %v119 = vpack.c.b16 %v95, %v93
  %v120 = vpack.c.b16 %v98, %v96
  %v121 = vpack.c.b16 %v99, %v97
  %v122 = vpack.c.b16 %v102, %v100
  %v123 = vpack.c.b16 %v103, %v101
  %v124 = vpack.c.b16 %v106, %v104
  %v125 = vpack.c.b16 %v107, %v105
  %v126 = vpack.c.b16 %v110, %v108
  %v127 = vpack.c.b16 %v111, %v109
  %144 = vmatpush.bf16.msra.mxu0 %v126
  %145 = vmatpush.bf16.msra.mxu0 %v124
  %146 = vmatpush.bf16.msra.mxu0 %v122
  %147 = vmatpush.bf16.msra.mxu0 %v120
  %148 = vmatpush.bf16.msra.mxu0 %v118
  %149 = vmatpush.bf16.msra.mxu0 %v116
  %150 = vmatpush.bf16.msra.mxu0 %v114
  %151 = vmatpush.bf16.msra.mxu0 %v112
  %152 = vmatmul.bf16.gmra.mxu0 %v60
  %v153 = vpop.f32.mrf.mxu0
  %v154 = vadd.f32 %v48, %v153
  %v155 = vpop.f32.mrf.mxu0
  %v156 = vadd.f32 %v48, %v155
  %157 = vmatmul.bf16.gmra.mxu0 %v61
  %v158 = vpop.f32.mrf.mxu0
  %v159 = vadd.f32 %v48, %v158
  %v160 = vpop.f32.mrf.mxu0
  %v161 = vadd.f32 %v48, %v160
  %162 = vdwg.mxu0
  %163 = vmatpush.bf16.msra.mxu0 %v127
  %164 = vmatpush.bf16.msra.mxu0 %v125
  %165 = vmatpush.bf16.msra.mxu0 %v123
  %166 = vmatpush.bf16.msra.mxu0 %v121
  %167 = vmatpush.bf16.msra.mxu0 %v119
  %168 = vmatpush.bf16.msra.mxu0 %v117
  %169 = vmatpush.bf16.msra.mxu0 %v115
  %170 = vmatpush.bf16.msra.mxu0 %v113
  %171 = vmatmul.bf16.gmra.mxu0 %v60
  %v172 = vpop.f32.mrf.mxu0
  %v173 = vadd.f32 %v49, %v172
  %v174 = vpop.f32.mrf.mxu0
  %v175 = vadd.f32 %v49, %v174
  %176 = vmatmul.bf16.gmra.mxu0 %v61
  %v177 = vpop.f32.mrf.mxu0
  %v178 = vadd.f32 %v49, %v177
  %v179 = vpop.f32.mrf.mxu0
  %v180 = vadd.f32 %v49, %v179
  %181 = vdwg.mxu0
  %v182 = vmax.f32 %v154, 0.0
  %v183 = vmax.f32 %v173, 0.0
  %v184 = vmax.f32 %v156, 0.0
  %v185 = vmax.f32 %v175, 0.0
  %v186 = vmax.f32 %v159, 0.0
  %v187 = vmax.f32 %v178, 0.0
  %v188 = vmax.f32 %v161, 0.0
  %v189 = vmax.f32 %v180, 0.0
  %v190 = vpack.c.bf16 %v184, %v182
  %v191 = vpack.c.bf16 %v185, %v183
  %v192 = vpack.c.bf16 %v188, %v186
  %v193 = vpack.c.bf16 %v189, %v187
  %v194 = vld [vmem:[%s3] sm:$0xff]
  %v195 = vld [vmem:[%s3 + $0x8] sm:$0xff]
  %v196 = vld [vmem:[%s3 + $0x10] sm:$0xff]
  %v197 = vld [vmem:[%s3 + $0x18] sm:$0xff]
  %v198 = vld [vmem:[%s3 + $0x20] sm:$0xff]
  %v199 = vld [vmem:[%s3 + $0x28] sm:$0xff]
  %v200 = vld [vmem:[%s3 + $0x30] sm:$0xff]
  %v201 = vld [vmem:[%s3 + $0x38] sm:$0xff]
  %v202 = vld [vmem:[%s3 + $0x40] sm:$0xff]
  %v203 = vld [vmem:[%s3 + $0x48] sm:$0xff]
  %v204 = vld [vmem:[%s3 + $0x50] sm:$0xff]
  %v205 = vld [vmem:[%s3 + $0x58] sm:$0xff]
  %v206 = vld [vmem:[%s3 + $0x60] sm:$0xff]
  %v207 = vld [vmem:[%s3 + $0x68] sm:$0xff]
  %v208 = vld [vmem:[%s3 + $0x70] sm:$0xff]
  %v209 = vld [vmem:[%s3 + $0x78] sm:$0xff]
  %v210 = vld [vmem:[%s3 + $0x80] sm:$0xff]
  %v211 = vld [vmem:[%s3 + $0x88] sm:$0xff]
  %v212 = vld [vmem:[%s3 + $0x90] sm:$0xff]
  %v213 = vld [vmem:[%s3 + $0x98] sm:$0xff]
  %v214 = vld [vmem:[%s3 + $0xa0] sm:$0xff]
  %v215 = vld [vmem:[%s3 + $0xa8] sm:$0xff]
  %v216 = vld [vmem:[%s3 + $0xb0] sm:$0xff]
  %v217 = vld [vmem:[%s3 + $0xb8] sm:$0xff]
  %v218 = vld [vmem:[%s3 + $0xc0] sm:$0xff]
  %v219 = vld [vmem:[%s3 + $0xc8] sm:$0xff]
  %v220 = vld [vmem:[%s3 + $0xd0] sm:$0xff]
  %v221 = vld [vmem:[%s3 + $0xd8] sm:$0xff]
  %v222 = vld [vmem:[%s3 + $0xe0] sm:$0xff]
  %v223 = vld [vmem:[%s3 + $0xe8] sm:$0xff]
  %v224 = vld [vmem:[%s3 + $0xf0] sm:$0xff]
  %v225 = vld [vmem:[%s3 + $0xf8] sm:$0xff]
  %v226 = vld [vmem:[%s4] sm:$0x3]
  %v228 = vperm.slane %v226, 0
  %v229 = vperm.slane %v226, 1
  %v264 = vunpack.c.l.b16 %v194
  %v265 = vunpack.c.h.b16 %v194
  %v266 = vunpack.c.l.b16 %v195
  %v267 = vunpack.c.h.b16 %v195
  %v268 = vunpack.c.l.b16 %v196
  %v269 = vunpack.c.h.b16 %v196
  %v270 = vunpack.c.l.b16 %v197
  %v271 = vunpack.c.h.b16 %v197
  %v272 = vunpack.c.l.b16 %v198
  %v273 = vunpack.c.h.b16 %v198
  %v274 = vunpack.c.l.b16 %v199
  %v275 = vunpack.c.h.b16 %v199
  %v276 = vunpack.c.l.b16 %v200
  %v277 = vunpack.c.h.b16 %v200
  %v278 = vunpack.c.l.b16 %v201
  %v279 = vunpack.c.h.b16 %v201
  %v280 = vunpack.c.l.b16 %v202
  %v281 = vunpack.c.h.b16 %v202
  %v282 = vunpack.c.l.b16 %v203
  %v283 = vunpack.c.h.b16 %v203
  %v284 = vunpack.c.l.b16 %v204
  %v285 = vunpack.c.h.b16 %v204
  %v286 = vunpack.c.l.b16 %v205
  %v287 = vunpack.c.h.b16 %v205
  %v288 = vunpack.c.l.b16 %v206
  %v289 = vunpack.c.h.b16 %v206
  %v290 = vunpack.c.l.b16 %v207
  %v291 = vunpack.c.h.b16 %v207
  %v292 = vunpack.c.l.b16 %v208
  %v293 = vunpack.c.h.b16 %v208
  %v294 = vunpack.c.l.b16 %v209
  %v295 = vunpack.c.h.b16 %v209
  %v296 = vunpack.c.l.b16 %v210
  %v297 = vunpack.c.h.b16 %v210
  %v298 = vunpack.c.l.b16 %v211
  %v299 = vunpack.c.h.b16 %v211
  %v300 = vunpack.c.l.b16 %v212
  %v301 = vunpack.c.h.b16 %v212
  %v302 = vunpack.c.l.b16 %v213
  %v303 = vunpack.c.h.b16 %v213
  %v304 = vunpack.c.l.b16 %v214
  %v305 = vunpack.c.h.b16 %v214
  %v306 = vunpack.c.l.b16 %v215
  %v307 = vunpack.c.h.b16 %v215
  %v308 = vunpack.c.l.b16 %v216
  %v309 = vunpack.c.h.b16 %v216
  %v310 = vunpack.c.l.b16 %v217
  %v311 = vunpack.c.h.b16 %v217
  %v312 = vunpack.c.l.b16 %v218
  %v313 = vunpack.c.h.b16 %v218
  %v314 = vunpack.c.l.b16 %v219
  %v315 = vunpack.c.h.b16 %v219
  %v316 = vunpack.c.l.b16 %v220
  %v317 = vunpack.c.h.b16 %v220
  %v318 = vunpack.c.l.b16 %v221
  %v319 = vunpack.c.h.b16 %v221
  %v320 = vunpack.c.l.b16 %v222
  %v321 = vunpack.c.h.b16 %v222
  %v322 = vunpack.c.l.b16 %v223
  %v323 = vunpack.c.h.b16 %v223
  %v324 = vunpack.c.l.b16 %v224
  %v325 = vunpack.c.h.b16 %v224
  %v326 = vunpack.c.l.b16 %v225
  %v327 = vunpack.c.h.b16 %v225
  %v328 = vpack.c.b16 %v266, %v264
  %v329 = vpack.c.b16 %v267, %v265
  %v330 = vpack.c.b16 %v270, %v268
  %v331 = vpack.c.b16 %v271, %v269
  %v332 = vpack.c.b16 %v274, %v272
  %v333 = vpack.c.b16 %v275, %v273
  %v334 = vpack.c.b16 %v278, %v276
  %v335 = vpack.c.b16 %v279, %v277
  %v336 = vpack.c.b16 %v282, %v280
  %v337 = vpack.c.b16 %v283, %v281
  %v338 = vpack.c.b16 %v286, %v284
  %v339 = vpack.c.b16 %v287, %v285
  %v340 = vpack.c.b16 %v290, %v288
  %v341 = vpack.c.b16 %v291, %v289
  %v342 = vpack.c.b16 %v294, %v292
  %v343 = vpack.c.b16 %v295, %v293
  %v344 = vpack.c.b16 %v298, %v296
  %v345 = vpack.c.b16 %v299, %v297
  %v346 = vpack.c.b16 %v302, %v300
  %v347 = vpack.c.b16 %v303, %v301
  %v348 = vpack.c.b16 %v306, %v304
  %v349 = vpack.c.b16 %v307, %v305
  %v350 = vpack.c.b16 %v310, %v308
  %v351 = vpack.c.b16 %v311, %v309
  %v352 = vpack.c.b16 %v314, %v312
  %v353 = vpack.c.b16 %v315, %v313
  %v354 = vpack.c.b16 %v318, %v316
  %v355 = vpack.c.b16 %v319, %v317
  %v356 = vpack.c.b16 %v322, %v320
  %v357 = vpack.c.b16 %v323, %v321
  %v358 = vpack.c.b16 %v326, %v324
  %v359 = vpack.c.b16 %v327, %v325
  %392 = vmatpush.bf16.msra.mxu0 %v342
  %393 = vmatpush.bf16.msra.mxu0 %v340
  %394 = vmatpush.bf16.msra.mxu0 %v338
  %395 = vmatpush.bf16.msra.mxu0 %v336
  %396 = vmatpush.bf16.msra.mxu0 %v334
  %397 = vmatpush.bf16.msra.mxu0 %v332
  %398 = vmatpush.bf16.msra.mxu0 %v330
  %399 = vmatpush.bf16.msra.mxu0 %v328
  %400 = vmatmul.bf16.gmra.mxu0 %v190
  %v401 = vpop.f32.mrf.mxu0
  %v402 = vadd.f32 %v228, %v401
  %v403 = vpop.f32.mrf.mxu0
  %v404 = vadd.f32 %v228, %v403
  %405 = vmatmul.bf16.gmra.mxu0 %v192
  %v406 = vpop.f32.mrf.mxu0
  %v407 = vadd.f32 %v228, %v406
  %v408 = vpop.f32.mrf.mxu0
  %v409 = vadd.f32 %v228, %v408
  %410 = vdwg.mxu0
  %411 = vmatpush.bf16.msra.mxu0 %v358
  %412 = vmatpush.bf16.msra.mxu0 %v356
  %413 = vmatpush.bf16.msra.mxu0 %v354
  %414 = vmatpush.bf16.msra.mxu0 %v352
  %415 = vmatpush.bf16.msra.mxu0 %v350
  %416 = vmatpush.bf16.msra.mxu0 %v348
  %417 = vmatpush.bf16.msra.mxu0 %v346
  %418 = vmatpush.bf16.msra.mxu0 %v344
  %419 = vmatmul.bf16.gmra.mxu0 %v191
  %v420 = vpop.f32.mrf.mxu0
  %v421 = vadd.f32 %v402, %v420
  %v422 = vpop.f32.mrf.mxu0
  %v423 = vadd.f32 %v404, %v422
  %424 = vmatmul.bf16.gmra.mxu0 %v193
  %v425 = vpop.f32.mrf.mxu0
  %v426 = vadd.f32 %v407, %v425
  %v427 = vpop.f32.mrf.mxu0
  %v428 = vadd.f32 %v409, %v427
  %429 = vdwg.mxu0
  %430 = vmatpush.bf16.msra.mxu0 %v343
  %431 = vmatpush.bf16.msra.mxu0 %v341
  %432 = vmatpush.bf16.msra.mxu0 %v339
  %433 = vmatpush.bf16.msra.mxu0 %v337
  %434 = vmatpush.bf16.msra.mxu0 %v335
  %435 = vmatpush.bf16.msra.mxu0 %v333
  %436 = vmatpush.bf16.msra.mxu0 %v331
  %437 = vmatpush.bf16.msra.mxu0 %v329
  %438 = vmatmul.bf16.gmra.mxu0 %v190
  %v439 = vpop.f32.mrf.mxu0
  %v440 = vadd.f32 %v229, %v439
  %v441 = vpop.f32.mrf.mxu0
  %v442 = vadd.f32 %v229, %v441
  %443 = vmatmul.bf16.gmra.mxu0 %v192
  %v444 = vpop.f32.mrf.mxu0
  %v445 = vadd.f32 %v229, %v444
  %v446 = vpop.f32.mrf.mxu0
  %v447 = vadd.f32 %v229, %v446
  %448 = vdwg.mxu0
  %449 = vmatpush.bf16.msra.mxu0 %v359
  %450 = vmatpush.bf16.msra.mxu0 %v357
  %451 = vmatpush.bf16.msra.mxu0 %v355
  %452 = vmatpush.bf16.msra.mxu0 %v353
  %453 = vmatpush.bf16.msra.mxu0 %v351
  %454 = vmatpush.bf16.msra.mxu0 %v349
  %455 = vmatpush.bf16.msra.mxu0 %v347
  %456 = vmatpush.bf16.msra.mxu0 %v345
  %457 = vmatmul.bf16.gmra.mxu0 %v191
  %v458 = vpop.f32.mrf.mxu0
  %v459 = vadd.f32 %v440, %v458
  %v460 = vpop.f32.mrf.mxu0
  %v461 = vadd.f32 %v442, %v460
  %462 = vmatmul.bf16.gmra.mxu0 %v193
  %v463 = vpop.f32.mrf.mxu0
  %v464 = vadd.f32 %v445, %v463
  %v465 = vpop.f32.mrf.mxu0
  %v466 = vadd.f32 %v447, %v465
  %467 = vdwg.mxu0
  %v468 = vmax.f32 %v421, 0.0
  %v469 = vmax.f32 %v459, 0.0
  %v470 = vmax.f32 %v423, 0.0
  %v471 = vmax.f32 %v461, 0.0
  %v472 = vmax.f32 %v426, 0.0
  %v473 = vmax.f32 %v464, 0.0
  %v474 = vmax.f32 %v428, 0.0
  %v475 = vmax.f32 %v466, 0.0
  %v476 = vpack.c.bf16 %v470, %v468
  %v477 = vpack.c.bf16 %v471, %v469
  %v478 = vpack.c.bf16 %v474, %v472
  %v479 = vpack.c.bf16 %v475, %v473
  %v480 = vld [vmem:[%s5] sm:$0xff]
  %v481 = vld [vmem:[%s5 + $0x8] sm:$0xff]
  %v482 = vld [vmem:[%s5 + $0x10] sm:$0xff]
  %v483 = vld [vmem:[%s5 + $0x18] sm:$0xff]
  %v484 = vld [vmem:[%s5 + $0x20] sm:$0xff]
  %v485 = vld [vmem:[%s5 + $0x28] sm:$0xff]
  %v486 = vld [vmem:[%s5 + $0x30] sm:$0xff]
  %v487 = vld [vmem:[%s5 + $0x38] sm:$0xff]
  %v488 = vld [vmem:[%s5 + $0x40] sm:$0xff]
  %v489 = vld [vmem:[%s5 + $0x48] sm:$0xff]
  %v490 = vld [vmem:[%s5 + $0x50] sm:$0xff]
  %v491 = vld [vmem:[%s5 + $0x58] sm:$0xff]
  %v492 = vld [vmem:[%s5 + $0x60] sm:$0xff]
  %v493 = vld [vmem:[%s5 + $0x68] sm:$0xff]
  %v494 = vld [vmem:[%s5 + $0x70] sm:$0xff]
  %v495 = vld [vmem:[%s5 + $0x78] sm:$0xff]
  %v496 = vld [vmem:[%s5 + $0x80] sm:$0xff]
  %v497 = vld [vmem:[%s5 + $0x88] sm:$0xff]
  %v498 = vld [vmem:[%s5 + $0x90] sm:$0xff]
  %v499 = vld [vmem:[%s5 + $0x98] sm:$0xff]
  %v500 = vld [vmem:[%s5 + $0xa0] sm:$0xff]
  %v501 = vld [vmem:[%s5 + $0xa8] sm:$0xff]
  %v502 = vld [vmem:[%s5 + $0xb0] sm:$0xff]
  %v503 = vld [vmem:[%s5 + $0xb8] sm:$0xff]
  %v504 = vld [vmem:[%s5 + $0xc0] sm:$0xff]
  %v505 = vld [vmem:[%s5 + $0xc8] sm:$0xff]
  %v506 = vld [vmem:[%s5 + $0xd0] sm:$0xff]
  %v507 = vld [vmem:[%s5 + $0xd8] sm:$0xff]
  %v508 = vld [vmem:[%s5 + $0xe0] sm:$0xff]
  %v509 = vld [vmem:[%s5 + $0xe8] sm:$0xff]
  %v510 = vld [vmem:[%s5 + $0xf0] sm:$0xff]
  %v511 = vld [vmem:[%s5 + $0xf8] sm:$0xff]
  %v512 = vld [vmem:[%s5 + $0x100] sm:$0xff]
  %v513 = vld [vmem:[%s5 + $0x108] sm:$0xff]
  %v514 = vld [vmem:[%s5 + $0x110] sm:$0xff]
  %v515 = vld [vmem:[%s5 + $0x118] sm:$0xff]
  %v516 = vld [vmem:[%s5 + $0x120] sm:$0xff]
  %v517 = vld [vmem:[%s5 + $0x128] sm:$0xff]
  %v518 = vld [vmem:[%s5 + $0x130] sm:$0xff]
  %v519 = vld [vmem:[%s5 + $0x138] sm:$0xff]
  %v520 = vld [vmem:[%s5 + $0x140] sm:$0xff]
  %v521 = vld [vmem:[%s5 + $0x148] sm:$0xff]
  %v522 = vld [vmem:[%s5 + $0x150] sm:$0xff]
  %v523 = vld [vmem:[%s5 + $0x158] sm:$0xff]
  %v524 = vld [vmem:[%s5 + $0x160] sm:$0xff]
  %v525 = vld [vmem:[%s5 + $0x168] sm:$0xff]
  %v526 = vld [vmem:[%s5 + $0x170] sm:$0xff]
  %v527 = vld [vmem:[%s5 + $0x178] sm:$0xff]
  %v528 = vld [vmem:[%s5 + $0x180] sm:$0xff]
  %v529 = vld [vmem:[%s5 + $0x188] sm:$0xff]
  %v530 = vld [vmem:[%s5 + $0x190] sm:$0xff]
  %v531 = vld [vmem:[%s5 + $0x198] sm:$0xff]
  %v532 = vld [vmem:[%s5 + $0x1a0] sm:$0xff]
  %v533 = vld [vmem:[%s5 + $0x1a8] sm:$0xff]
  %v534 = vld [vmem:[%s5 + $0x1b0] sm:$0xff]
  %v535 = vld [vmem:[%s5 + $0x1b8] sm:$0xff]
  %v536 = vld [vmem:[%s5 + $0x1c0] sm:$0xff]
  %v537 = vld [vmem:[%s5 + $0x1c8] sm:$0xff]
  %v538 = vld [vmem:[%s5 + $0x1d0] sm:$0xff]
  %v539 = vld [vmem:[%s5 + $0x1d8] sm:$0xff]
  %v540 = vld [vmem:[%s5 + $0x1e0] sm:$0xff]
  %v541 = vld [vmem:[%s5 + $0x1e8] sm:$0xff]
  %v542 = vld [vmem:[%s5 + $0x1f0] sm:$0xff]
  %v543 = vld [vmem:[%s5 + $0x1f8] sm:$0xff]
  %v544 = vld [vmem:[%s6] sm:$0xf]
  %v546 = vperm.slane %v544, 0
  %v547 = vperm.slane %v544, 1
  %v548 = vperm.slane %v544, 2
  %v549 = vperm.slane %v544, 3
  %v618 = vunpack.c.l.b16 %v480
  %v619 = vunpack.c.h.b16 %v480
  %v620 = vunpack.c.l.b16 %v481
  %v621 = vunpack.c.h.b16 %v481
  %v622 = vunpack.c.l.b16 %v482
  %v623 = vunpack.c.h.b16 %v482
  %v624 = vunpack.c.l.b16 %v483
  %v625 = vunpack.c.h.b16 %v483
  %v626 = vunpack.c.l.b16 %v484
  %v627 = vunpack.c.h.b16 %v484
  %v628 = vunpack.c.l.b16 %v485
  %v629 = vunpack.c.h.b16 %v485
  %v630 = vunpack.c.l.b16 %v486
  %v631 = vunpack.c.h.b16 %v486
  %v632 = vunpack.c.l.b16 %v487
  %v633 = vunpack.c.h.b16 %v487
  %v634 = vunpack.c.l.b16 %v488
  %v635 = vunpack.c.h.b16 %v488
  %v636 = vunpack.c.l.b16 %v489
  %v637 = vunpack.c.h.b16 %v489
  %v638 = vunpack.c.l.b16 %v490
  %v639 = vunpack.c.h.b16 %v490
  %v640 = vunpack.c.l.b16 %v491
  %v641 = vunpack.c.h.b16 %v491
  %v642 = vunpack.c.l.b16 %v492
  %v643 = vunpack.c.h.b16 %v492
  %v644 = vunpack.c.l.b16 %v493
  %v645 = vunpack.c.h.b16 %v493
  %v646 = vunpack.c.l.b16 %v494
  %v647 = vunpack.c.h.b16 %v494
  %v648 = vunpack.c.l.b16 %v495
  %v649 = vunpack.c.h.b16 %v495
  %v650 = vunpack.c.l.b16 %v496
  %v651 = vunpack.c.h.b16 %v496
  %v652 = vunpack.c.l.b16 %v497
  %v653 = vunpack.c.h.b16 %v497
  %v654 = vunpack.c.l.b16 %v498
  %v655 = vunpack.c.h.b16 %v498
  %v656 = vunpack.c.l.b16 %v499
  %v657 = vunpack.c.h.b16 %v499
  %v658 = vunpack.c.l.b16 %v500
  %v659 = vunpack.c.h.b16 %v500
  %v660 = vunpack.c.l.b16 %v501
  %v661 = vunpack.c.h.b16 %v501
  %v662 = vunpack.c.l.b16 %v502
  %v663 = vunpack.c.h.b16 %v502
  %v664 = vunpack.c.l.b16 %v503
  %v665 = vunpack.c.h.b16 %v503
  %v666 = vunpack.c.l.b16 %v504
  %v667 = vunpack.c.h.b16 %v504
  %v668 = vunpack.c.l.b16 %v505
  %v669 = vunpack.c.h.b16 %v505
  %v670 = vunpack.c.l.b16 %v506
  %v671 = vunpack.c.h.b16 %v506
  %v672 = vunpack.c.l.b16 %v507
  %v673 = vunpack.c.h.b16 %v507
  %v674 = vunpack.c.l.b16 %v508
  %v675 = vunpack.c.h.b16 %v508
  %v676 = vunpack.c.l.b16 %v509
  %v677 = vunpack.c.h.b16 %v509
  %v678 = vunpack.c.l.b16 %v510
  %v679 = vunpack.c.h.b16 %v510
  %v680 = vunpack.c.l.b16 %v511
  %v681 = vunpack.c.h.b16 %v511
  %v682 = vunpack.c.l.b16 %v512
  %v683 = vunpack.c.h.b16 %v512
  %v684 = vunpack.c.l.b16 %v513
  %v685 = vunpack.c.h.b16 %v513
  %v686 = vunpack.c.l.b16 %v514
  %v687 = vunpack.c.h.b16 %v514
  %v688 = vunpack.c.l.b16 %v515
  %v689 = vunpack.c.h.b16 %v515
  %v690 = vunpack.c.l.b16 %v516
  %v691 = vunpack.c.h.b16 %v516
  %v692 = vunpack.c.l.b16 %v517
  %v693 = vunpack.c.h.b16 %v517
  %v694 = vunpack.c.l.b16 %v518
  %v695 = vunpack.c.h.b16 %v518
  %v696 = vunpack.c.l.b16 %v519
  %v697 = vunpack.c.h.b16 %v519
  %v698 = vunpack.c.l.b16 %v520
  %v699 = vunpack.c.h.b16 %v520
  %v700 = vunpack.c.l.b16 %v521
  %v701 = vunpack.c.h.b16 %v521
  %v702 = vunpack.c.l.b16 %v522
  %v703 = vunpack.c.h.b16 %v522
  %v704 = vunpack.c.l.b16 %v523
  %v705 = vunpack.c.h.b16 %v523
  %v706 = vunpack.c.l.b16 %v524
  %v707 = vunpack.c.h.b16 %v524
  %v708 = vunpack.c.l.b16 %v525
  %v709 = vunpack.c.h.b16 %v525
  %v710 = vunpack.c.l.b16 %v526
  %v711 = vunpack.c.h.b16 %v526
  %v712 = vunpack.c.l.b16 %v527
  %v713 = vunpack.c.h.b16 %v527
  %v714 = vunpack.c.l.b16 %v528
  %v715 = vunpack.c.h.b16 %v528
  %v716 = vunpack.c.l.b16 %v529
  %v717 = vunpack.c.h.b16 %v529
  %v718 = vunpack.c.l.b16 %v530
  %v719 = vunpack.c.h.b16 %v530
  %v720 = vunpack.c.l.b16 %v531
  %v721 = vunpack.c.h.b16 %v531
  %v722 = vunpack.c.l.b16 %v532
  %v723 = vunpack.c.h.b16 %v532
  %v724 = vunpack.c.l.b16 %v533
  %v725 = vunpack.c.h.b16 %v533
  %v726 = vunpack.c.l.b16 %v534
  %v727 = vunpack.c.h.b16 %v534
  %v728 = vunpack.c.l.b16 %v535
  %v729 = vunpack.c.h.b16 %v535
  %v730 = vunpack.c.l.b16 %v536
  %v731 = vunpack.c.h.b16 %v536
  %v732 = vunpack.c.l.b16 %v537
  %v733 = vunpack.c.h.b16 %v537
  %v734 = vunpack.c.l.b16 %v538
  %v735 = vunpack.c.h.b16 %v538
  %v736 = vunpack.c.l.b16 %v539
  %v737 = vunpack.c.h.b16 %v539
  %v738 = vunpack.c.l.b16 %v540
  %v739 = vunpack.c.h.b16 %v540
  %v740 = vunpack.c.l.b16 %v541
  %v741 = vunpack.c.h.b16 %v541
  %v742 = vunpack.c.l.b16 %v542
  %v743 = vunpack.c.h.b16 %v542
  %v744 = vunpack.c.l.b16 %v543
  %v745 = vunpack.c.h.b16 %v543
  %v746 = vpack.c.b16 %v622, %v618
  %v747 = vpack.c.b16 %v623, %v619
  %v748 = vpack.c.b16 %v624, %v620
  %v749 = vpack.c.b16 %v625, %v621
  %v750 = vpack.c.b16 %v630, %v626
  %v751 = vpack.c.b16 %v631, %v627
  %v752 = vpack.c.b16 %v632, %v628
  %v753 = vpack.c.b16 %v633, %v629
  %v754 = vpack.c.b16 %v638, %v634
  %v755 = vpack.c.b16 %v639, %v635
  %v756 = vpack.c.b16 %v640, %v636
  %v757 = vpack.c.b16 %v641, %v637
  %v758 = vpack.c.b16 %v646, %v642
  %v759 = vpack.c.b16 %v647, %v643
  %v760 = vpack.c.b16 %v648, %v644
  %v761 = vpack.c.b16 %v649, %v645
  %v762 = vpack.c.b16 %v654, %v650
  %v763 = vpack.c.b16 %v655, %v651
  %v764 = vpack.c.b16 %v656, %v652
  %v765 = vpack.c.b16 %v657, %v653
  %v766 = vpack.c.b16 %v662, %v658
  %v767 = vpack.c.b16 %v663, %v659
  %v768 = vpack.c.b16 %v664, %v660
  %v769 = vpack.c.b16 %v665, %v661
  %v770 = vpack.c.b16 %v670, %v666
  %v771 = vpack.c.b16 %v671, %v667
  %v772 = vpack.c.b16 %v672, %v668
  %v773 = vpack.c.b16 %v673, %v669
  %v774 = vpack.c.b16 %v678, %v674
  %v775 = vpack.c.b16 %v679, %v675
  %v776 = vpack.c.b16 %v680, %v676
  %v777 = vpack.c.b16 %v681, %v677
  %v778 = vpack.c.b16 %v686, %v682
  %v779 = vpack.c.b16 %v687, %v683
  %v780 = vpack.c.b16 %v688, %v684
  %v781 = vpack.c.b16 %v689, %v685
  %v782 = vpack.c.b16 %v694, %v690
  %v783 = vpack.c.b16 %v695, %v691
  %v784 = vpack.c.b16 %v696, %v692
  %v785 = vpack.c.b16 %v697, %v693
  %v786 = vpack.c.b16 %v702, %v698
  %v787 = vpack.c.b16 %v703, %v699
  %v788 = vpack.c.b16 %v704, %v700
  %v789 = vpack.c.b16 %v705, %v701
  %v790 = vpack.c.b16 %v710, %v706
  %v791 = vpack.c.b16 %v711, %v707
  %v792 = vpack.c.b16 %v712, %v708
  %v793 = vpack.c.b16 %v713, %v709
  %v794 = vpack.c.b16 %v718, %v714
  %v795 = vpack.c.b16 %v719, %v715
  %v796 = vpack.c.b16 %v720, %v716
  %v797 = vpack.c.b16 %v721, %v717
  %v798 = vpack.c.b16 %v726, %v722
  %v799 = vpack.c.b16 %v727, %v723
  %v800 = vpack.c.b16 %v728, %v724
  %v801 = vpack.c.b16 %v729, %v725
  %v802 = vpack.c.b16 %v734, %v730
  %v803 = vpack.c.b16 %v735, %v731
  %v804 = vpack.c.b16 %v736, %v732
  %v805 = vpack.c.b16 %v737, %v733
  %v806 = vpack.c.b16 %v742, %v738
  %v807 = vpack.c.b16 %v743, %v739
  %v808 = vpack.c.b16 %v744, %v740
  %v809 = vpack.c.b16 %v745, %v741
  %874 = vmatpush.bf16.msra.mxu0 %v774
  %875 = vmatpush.bf16.msra.mxu0 %v770
  %876 = vmatpush.bf16.msra.mxu0 %v766
  %877 = vmatpush.bf16.msra.mxu0 %v762
  %878 = vmatpush.bf16.msra.mxu0 %v758
  %879 = vmatpush.bf16.msra.mxu0 %v754
  %880 = vmatpush.bf16.msra.mxu0 %v750
  %881 = vmatpush.bf16.msra.mxu0 %v746
  %882 = vmatmul.bf16.gmra.mxu0 %v476
  %v883 = vpop.f32.mrf.mxu0
  %v884 = vadd.f32 %v546, %v883
  %v885 = vpop.f32.mrf.mxu0
  %v886 = vadd.f32 %v546, %v885
  %887 = vmatmul.bf16.gmra.mxu0 %v478
  %v888 = vpop.f32.mrf.mxu0
  %v889 = vadd.f32 %v546, %v888
  %v890 = vpop.f32.mrf.mxu0
  %v891 = vadd.f32 %v546, %v890
  %892 = vdwg.mxu0
  %893 = vmatpush.bf16.msra.mxu0 %v806
  %894 = vmatpush.bf16.msra.mxu0 %v802
  %895 = vmatpush.bf16.msra.mxu0 %v798
  %896 = vmatpush.bf16.msra.mxu0 %v794
  %897 = vmatpush.bf16.msra.mxu0 %v790
  %898 = vmatpush.bf16.msra.mxu0 %v786
  %899 = vmatpush.bf16.msra.mxu0 %v782
  %900 = vmatpush.bf16.msra.mxu0 %v778
  %901 = vmatmul.bf16.gmra.mxu0 %v477
  %v902 = vpop.f32.mrf.mxu0
  %v903 = vadd.f32 %v884, %v902
  %v904 = vpop.f32.mrf.mxu0
  %v905 = vadd.f32 %v886, %v904
  %906 = vmatmul.bf16.gmra.mxu0 %v479
  %v907 = vpop.f32.mrf.mxu0
  %v908 = vadd.f32 %v889, %v907
  %v909 = vpop.f32.mrf.mxu0
  %v910 = vadd.f32 %v891, %v909
  %911 = vdwg.mxu0
  %912 = vmatpush.bf16.msra.mxu0 %v775
  %913 = vmatpush.bf16.msra.mxu0 %v771
  %914 = vmatpush.bf16.msra.mxu0 %v767
  %915 = vmatpush.bf16.msra.mxu0 %v763
  %916 = vmatpush.bf16.msra.mxu0 %v759
  %917 = vmatpush.bf16.msra.mxu0 %v755
  %918 = vmatpush.bf16.msra.mxu0 %v751
  %919 = vmatpush.bf16.msra.mxu0 %v747
  %920 = vmatmul.bf16.gmra.mxu0 %v476
  %v921 = vpop.f32.mrf.mxu0
  %v922 = vadd.f32 %v547, %v921
  %v923 = vpop.f32.mrf.mxu0
  %v924 = vadd.f32 %v547, %v923
  %925 = vmatmul.bf16.gmra.mxu0 %v478
  %v926 = vpop.f32.mrf.mxu0
  %v927 = vadd.f32 %v547, %v926
  %v928 = vpop.f32.mrf.mxu0
  %v929 = vadd.f32 %v547, %v928
  %930 = vdwg.mxu0
  %931 = vmatpush.bf16.msra.mxu0 %v807
  %932 = vmatpush.bf16.msra.mxu0 %v803
  %933 = vmatpush.bf16.msra.mxu0 %v799
  %934 = vmatpush.bf16.msra.mxu0 %v795
  %935 = vmatpush.bf16.msra.mxu0 %v791
  %936 = vmatpush.bf16.msra.mxu0 %v787
  %937 = vmatpush.bf16.msra.mxu0 %v783
  %938 = vmatpush.bf16.msra.mxu0 %v779
  %939 = vmatmul.bf16.gmra.mxu0 %v477
  %v940 = vpop.f32.mrf.mxu0
  %v941 = vadd.f32 %v922, %v940
  %v942 = vpop.f32.mrf.mxu0
  %v943 = vadd.f32 %v924, %v942
  %944 = vmatmul.bf16.gmra.mxu0 %v479
  %v945 = vpop.f32.mrf.mxu0
  %v946 = vadd.f32 %v927, %v945
  %v947 = vpop.f32.mrf.mxu0
  %v948 = vadd.f32 %v929, %v947
  %949 = vdwg.mxu0
  %950 = vmatpush.bf16.msra.mxu0 %v776
  %951 = vmatpush.bf16.msra.mxu0 %v772
  %952 = vmatpush.bf16.msra.mxu0 %v768
  %953 = vmatpush.bf16.msra.mxu0 %v764
  %954 = vmatpush.bf16.msra.mxu0 %v760
  %955 = vmatpush.bf16.msra.mxu0 %v756
  %956 = vmatpush.bf16.msra.mxu0 %v752
  %957 = vmatpush.bf16.msra.mxu0 %v748
  %958 = vmatmul.bf16.gmra.mxu0 %v476
  %v959 = vpop.f32.mrf.mxu0
  %v960 = vadd.f32 %v548, %v959
  %v961 = vpop.f32.mrf.mxu0
  %v962 = vadd.f32 %v548, %v961
  %963 = vmatmul.bf16.gmra.mxu0 %v478
  %v964 = vpop.f32.mrf.mxu0
  %v965 = vadd.f32 %v548, %v964
  %v966 = vpop.f32.mrf.mxu0
  %v967 = vadd.f32 %v548, %v966
  %968 = vdwg.mxu0
  %969 = vmatpush.bf16.msra.mxu0 %v808
  %970 = vmatpush.bf16.msra.mxu0 %v804
  %971 = vmatpush.bf16.msra.mxu0 %v800
  %972 = vmatpush.bf16.msra.mxu0 %v796
  %973 = vmatpush.bf16.msra.mxu0 %v792
  %974 = vmatpush.bf16.msra.mxu0 %v788
  %975 = vmatpush.bf16.msra.mxu0 %v784
  %976 = vmatpush.bf16.msra.mxu0 %v780
  %977 = vmatmul.bf16.gmra.mxu0 %v477
  %v978 = vpop.f32.mrf.mxu0
  %v979 = vadd.f32 %v960, %v978
  %v980 = vpop.f32.mrf.mxu0
  %v981 = vadd.f32 %v962, %v980
  %982 = vmatmul.bf16.gmra.mxu0 %v479
  %v983 = vpop.f32.mrf.mxu0
  %v984 = vadd.f32 %v965, %v983
  %v985 = vpop.f32.mrf.mxu0
  %v986 = vadd.f32 %v967, %v985
  %987 = vdwg.mxu0
  %988 = vmatpush.bf16.msra.mxu0 %v777
  %989 = vmatpush.bf16.msra.mxu0 %v773
  %990 = vmatpush.bf16.msra.mxu0 %v769
  %991 = vmatpush.bf16.msra.mxu0 %v765
  %992 = vmatpush.bf16.msra.mxu0 %v761
  %993 = vmatpush.bf16.msra.mxu0 %v757
  %994 = vmatpush.bf16.msra.mxu0 %v753
  %995 = vmatpush.bf16.msra.mxu0 %v749
  %996 = vmatmul.bf16.gmra.mxu0 %v476
  %v997 = vpop.f32.mrf.mxu0
  %v998 = vadd.f32 %v549, %v997
  %v999 = vpop.f32.mrf.mxu0
  %v1000 = vadd.f32 %v549, %v999
  %1001 = vmatmul.bf16.gmra.mxu0 %v478
  %v1002 = vpop.f32.mrf.mxu0
  %v1003 = vadd.f32 %v549, %v1002
  %v1004 = vpop.f32.mrf.mxu0
  %v1005 = vadd.f32 %v549, %v1004
  %1006 = vdwg.mxu0
  %1007 = vmatpush.bf16.msra.mxu0 %v809
  %1008 = vmatpush.bf16.msra.mxu0 %v805
  %1009 = vmatpush.bf16.msra.mxu0 %v801
  %1010 = vmatpush.bf16.msra.mxu0 %v797
  %1011 = vmatpush.bf16.msra.mxu0 %v793
  %1012 = vmatpush.bf16.msra.mxu0 %v789
  %1013 = vmatpush.bf16.msra.mxu0 %v785
  %1014 = vmatpush.bf16.msra.mxu0 %v781
  %1015 = vmatmul.bf16.gmra.mxu0 %v477
  %v1016 = vpop.f32.mrf.mxu0
  %v1017 = vadd.f32 %v998, %v1016
  %v1018 = vpop.f32.mrf.mxu0
  %v1019 = vadd.f32 %v1000, %v1018
  %1020 = vmatmul.bf16.gmra.mxu0 %v479
  %v1021 = vpop.f32.mrf.mxu0
  %v1022 = vadd.f32 %v1003, %v1021
  %v1023 = vpop.f32.mrf.mxu0
  %v1024 = vadd.f32 %v1005, %v1023
  %1025 = vdwg.mxu0
  %1026 = vst [vmem:[%s7] sm:$0xff] %v903
  %1027 = vst [vmem:[%s7 + $0x8] sm:$0xff] %v941
  %1028 = vst [vmem:[%s7 + $0x10] sm:$0xff] %v979
  %1029 = vst [vmem:[%s7 + $0x18] sm:$0xff] %v1017
  %1030 = vst [vmem:[%s7 + $0x20] sm:$0xff] %v905
  %1031 = vst [vmem:[%s7 + $0x28] sm:$0xff] %v943
  %1032 = vst [vmem:[%s7 + $0x30] sm:$0xff] %v981
  %1033 = vst [vmem:[%s7 + $0x38] sm:$0xff] %v1019
  %1034 = vst [vmem:[%s7 + $0x40] sm:$0xff] %v908
  %1035 = vst [vmem:[%s7 + $0x48] sm:$0xff] %v946
  %1036 = vst [vmem:[%s7 + $0x50] sm:$0xff] %v984
  %1037 = vst [vmem:[%s7 + $0x58] sm:$0xff] %v1022
  %1038 = vst [vmem:[%s7 + $0x60] sm:$0xff] %v910
  %1039 = vst [vmem:[%s7 + $0x68] sm:$0xff] %v948
  %1040 = vst [vmem:[%s7 + $0x70] sm:$0xff] %v986
  %1041 = vst [vmem:[%s7 + $0x78] sm:$0xff] %v1024
  // Predicated region
  $region30: #{_lambda_.1} parent=0 // pred_check
    _
  $region31: #{_lambda_.1} parent=0 // pred_check_branch
    %1043 = sbr.rel (0) target = $region33
  $region32: #{_lambda_.1} parent=0 // pred_region
    _
  $region33: #{_lambda_.1} parent=0 // pred_fallthru
    _
  // Predicated region
  $region34: #{_lambda_.1} parent=0 // pred_check
    _
  $region35: #{_lambda_.1} parent=0 // pred_check_branch
    %1045 = sbr.rel (0) target = $region37
  $region36: #{_lambda_.1} parent=0 // pred_region
    _
  $region37: #{_lambda_.1} parent=0 // pred_fallthru
    _

</llo_original>
